<compile_context>
chip_gen: v7x
topology: tpu7x:2x2x1
jax: 0.10.0
libtpu: 0.0.40
codegen_flags: <defaults>
</compile_context>

<pallas_src>
import jax
import jax.numpy as jnp
from jax.experimental import pallas as pl
from jax.experimental.pallas import tpu as pltpu


# -----------------------------------------------------------------------------
# Padding helpers
# -----------------------------------------------------------------------------
def _round_up(x, m):
    return ((x + m - 1) // m) * m


def _pad_axis(x, axis, target):
    pad = target - x.shape[axis]
    if pad <= 0:
        return x
    widths = [(0, 0)] * x.ndim
    widths[axis] = (0, pad)
    return jnp.pad(x, widths)


# -----------------------------------------------------------------------------
# Pallas kernel: batch-tiled pooled-MLP head (one grid step per batch tile)
# -----------------------------------------------------------------------------
def dacl_head_kernel(feat_ref, w1_ref, b1_ref, w2_ref, b2_ref, w3_ref, b3_ref,
                     out_ref):
    # feat block: (TN, H*W, C_pad) -- an entire batch tile in one step.
    # AdaptiveAvgPool2d(1) + view(N, -1): mean over spatial axis -> (TN, C_pad)
    pooled = jnp.mean(feat_ref[...], axis=1)

    # nn.Dropout is identity at inference time (no-op here).

    # classifier[0]: Linear(C -> hidden0) + ReLU   (zero-padded columns stay 0)
    h = jnp.dot(pooled, w1_ref[...], preferred_element_type=jnp.float32)
    h = jnp.maximum(h + b1_ref[...], 0.0)

    # classifier[1]: Linear(hidden0 -> hidden1) + ReLU
    h = jnp.dot(h, w2_ref[...], preferred_element_type=jnp.float32)
    h = jnp.maximum(h + b2_ref[...], 0.0)

    # classifier[2]: Linear(hidden1 -> num_class) -> logits (no activation)
    logits = jnp.dot(h, w3_ref[...], preferred_element_type=jnp.float32)
    out_ref[...] = logits + b3_ref[...]


def dacl_head(features_nhwc_flat, w1, b1, w2, b2, w3, b3, *, max_batch_tile=256):
    """features_nhwc_flat: (N, H*W, C) float32. Returns logits (N, num_class).

    NOTE: for the real backbone (C~=1280, 7x7 features, large serving batch),
    cast features/weights to bf16 on the HBM side (keep f32 accumulation) and
    keep the batch tile small enough for v7x's 64 MiB VMEM.
    """
    n, hw, c = features_nhwc_flat.shape
    h1 = w1.shape[1]
    h2 = w2.shape[1]
    nc = w3.shape[1]

    # Lane-dense padding: last dims -> multiples of 128, batch -> multiple of 8.
    c_p = _round_up(c, 128)
    h1_p = _round_up(h1, 128)
    h2_p = _round_up(h2, 128)
    nc_p = _round_up(nc, 128)

    n8 = _round_up(n, 8)
    tn = min(n8, max_batch_tile)       # batch tile (M rows fed to the MXU)
    n_p = _round_up(n, tn)
    grid = (n_p // tn,)

    feat_p = _pad_axis(_pad_axis(features_nhwc_flat, 0, n_p), 2, c_p)
    w1_p = _pad_axis(_pad_axis(w1, 0, c_p), 1, h1_p)
    b1_p = _pad_axis(b1, 1, h1_p)
    w2_p = _pad_axis(_pad_axis(w2, 0, h1_p), 1, h2_p)
    b2_p = _pad_axis(b2, 1, h2_p)
    w3_p = _pad_axis(_pad_axis(w3, 0, h2_p), 1, nc_p)
    b3_p = _pad_axis(b3, 1, nc_p)

    # Grid-invariant operands: whole array resident in VMEM, no double-buffer.
    vmem_full = pl.BlockSpec(memory_space=pltpu.MemorySpace.VMEM)

    out_p = pl.pallas_call(
        dacl_head_kernel,
        out_shape=jax.ShapeDtypeStruct((n_p, nc_p), jnp.float32),
        grid=grid,
        in_specs=[
            pl.BlockSpec((tn, hw, c_p), lambda i: (i, 0, 0)),   # features
            vmem_full,                                          # W1
            vmem_full,                                          # b1
            vmem_full,                                          # W2
            vmem_full,                                          # b2
            vmem_full,                                          # W3
            vmem_full,                                          # b3
        ],
        out_specs=pl.BlockSpec((tn, nc_p), lambda i: (i, 0)),
        compiler_params=pltpu.CompilerParams(
            dimension_semantics=("parallel",)),
    )(feat_p, w1_p, b1_p, w2_p, b2_p, w3_p, b3_p)

    # Slice padded rows / padded class columns back off.
    return out_p[:n, :nc]


# -----------------------------------------------------------------------------
# Parameter init (deterministic), mimicking nn.Linear default init
# -----------------------------------------------------------------------------
def init_linear(key, fan_in, fan_out):
    kw, kb = jax.random.split(key)
    bound = 1.0 / jnp.sqrt(jnp.float32(fan_in))
    # stored (in, out) -> kernel computes x @ W
    w = jax.random.uniform(kw, (fan_in, fan_out), jnp.float32, -bound, bound)
    b = jax.random.uniform(kb, (1, fan_out), jnp.float32, -bound, bound)
    return w, b


def reference_head(features_nchw, w1, b1, w2, b2, w3, b3):
    """Pure-JAX reference of DaclNet.forward after the backbone (eval mode)."""
    x = jnp.mean(features_nchw, axis=(2, 3))             # AdaptiveAvgPool2d(1) + flatten
    x = jnp.maximum(x @ w1 + b1, 0.0)                     # Linear + ReLU
    x = jnp.maximum(x @ w2 + b2, 0.0)                     # Linear + ReLU
    return x @ w3 + b3                                     # logits


# -----------------------------------------------------------------------------
if __name__ == "__main__":
    # Small synthetic config consistent with DaclNet('mobilenetv2',
    # hidden_layers=[32, 16], num_class=6): the backbone output feature map.
    N, C, H, W = 2, 64, 8, 8
    HIDDEN = [32, 16]
    NUM_CLASS = 6

    key = jax.random.PRNGKey(0)
    k_feat, k1, k2, k3 = jax.random.split(key, 4)

    # "base" output feature map in PyTorch NCHW layout.
    features_nchw = jax.random.normal(k_feat, (N, C, H, W), jnp.float32)

    # classifier parameters
    w1, b1 = init_linear(k1, C, HIDDEN[0])
    w2, b2 = init_linear(k2, HIDDEN[0], HIDDEN[1])
    w3, b3 = init_linear(k3, HIDDEN[1], NUM_CLASS)

    # Glue: NCHW -> (N, H*W, C) for the kernel.
    features_kernel = jnp.transpose(features_nchw, (0, 2, 3, 1)).reshape(N, H * W, C)

    logits = dacl_head(features_kernel, w1, b1, w2, b2, w3, b3)
    logits = jax.block_until_ready(logits)

    ref = reference_head(features_nchw, w1, b1, w2, b2, w3, b3)
    assert logits.shape == (N, NUM_CLASS)
    assert jnp.allclose(logits, ref, atol=1e-4, rtol=1e-4), "mismatch vs reference"

    print("KERNEL_OK")
</pallas_src>

<mosaic_0001>
module attributes {stable_mosaic.version = 11 : i64} {
  func.func @dacl_head_kernel(%arg0: i32, %arg1: memref<8x64x128xf32, #tpu.memory_space<vmem>>, %arg2: memref<128x128xf32, #tpu.memory_space<vmem>>, %arg3: memref<1x128xf32, #tpu.memory_space<vmem>>, %arg4: memref<128x128xf32, #tpu.memory_space<vmem>>, %arg5: memref<1x128xf32, #tpu.memory_space<vmem>>, %arg6: memref<128x128xf32, #tpu.memory_space<vmem>>, %arg7: memref<1x128xf32, #tpu.memory_space<vmem>>, %arg8: memref<8x128xf32, #tpu.memory_space<vmem>>) attributes {dimension_semantics = [#tpu.dimension_semantics<parallel>], iteration_bounds = array<i64: 1>, scalar_prefetch = 0 : i64, scratch_operands = 0 : i64, tpu.core_type = #tpu.core_type<tc>, window_params = [{transform_indices = @transform_0, window_bounds = array<i64: 8, 64, 128>}, {pipeline_mode = #tpu.pipeline_mode<synchronous>, transform_indices = @transform_1, window_bounds = array<i64: 128, 128>}, {pipeline_mode = #tpu.pipeline_mode<synchronous>, transform_indices = @transform_2, window_bounds = array<i64: 1, 128>}, {pipeline_mode = #tpu.pipeline_mode<synchronous>, transform_indices = @transform_3, window_bounds = array<i64: 128, 128>}, {pipeline_mode = #tpu.pipeline_mode<synchronous>, transform_indices = @transform_4, window_bounds = array<i64: 1, 128>}, {pipeline_mode = #tpu.pipeline_mode<synchronous>, transform_indices = @transform_5, window_bounds = array<i64: 128, 128>}, {pipeline_mode = #tpu.pipeline_mode<synchronous>, transform_indices = @transform_6, window_bounds = array<i64: 1, 128>}, {transform_indices = @transform_7, window_bounds = array<i64: 8, 128>}]} {
    %c0 = arith.constant 0 : index
    %c0_0 = arith.constant 0 : index
    %c0_1 = arith.constant 0 : index
    %0 = vector.load %arg1[%c0, %c0_0, %c0_1] : memref<8x64x128xf32, #tpu.memory_space<vmem>>, vector<8x64x128xf32>
    %cst = arith.constant dense<0.000000e+00> : vector<8x128xf32>
    %1 = vector.multi_reduction <add>, %0, %cst [1] : vector<8x64x128xf32> to vector<8x128xf32>
    %cst_2 = arith.constant 6.400000e+01 : f32
    %2 = vector.broadcast %cst_2 : f32 to vector<8x128xf32>
    %3 = arith.divf %1, %2 : vector<8x128xf32>
    %c0_3 = arith.constant 0 : index
    %c0_4 = arith.constant 0 : index
    %4 = vector.load %arg2[%c0_3, %c0_4] : memref<128x128xf32, #tpu.memory_space<vmem>>, vector<128x128xf32>
    %cst_5 = arith.constant dense<0.000000e+00> : vector<8x128xf32>
    %5 = tpu.matmul %3, %4, %cst_5 {dimension_numbers = #tpu.dot_dimension_numbers<[1], [0], [0], [1], [0, 0, 1, 1], [], []>} : vector<8x128xf32>, vector<128x128xf32>, vector<8x128xf32> -> vector<8x128xf32>
    %c0_6 = arith.constant 0 : index
    %c0_7 = arith.constant 0 : index
    %6 = vector.load %arg3[%c0_6, %c0_7] : memref<1x128xf32, #tpu.memory_space<vmem>>, vector<1x128xf32>
    %7 = vector.broadcast %6 : vector<1x128xf32> to vector<8x128xf32>
    %8 = arith.addf %5, %7 : vector<8x128xf32>
    %cst_8 = arith.constant 0.000000e+00 : f32
    %9 = vector.broadcast %cst_8 : f32 to vector<8x128xf32>
    %10 = arith.maximumf %8, %9 : vector<8x128xf32>
    %c0_9 = arith.constant 0 : index
    %c0_10 = arith.constant 0 : index
    %11 = vector.load %arg4[%c0_9, %c0_10] : memref<128x128xf32, #tpu.memory_space<vmem>>, vector<128x128xf32>
    %cst_11 = arith.constant dense<0.000000e+00> : vector<8x128xf32>
    %12 = tpu.matmul %10, %11, %cst_11 {dimension_numbers = #tpu.dot_dimension_numbers<[1], [0], [0], [1], [0, 0, 1, 1], [], []>} : vector<8x128xf32>, vector<128x128xf32>, vector<8x128xf32> -> vector<8x128xf32>
    %c0_12 = arith.constant 0 : index
    %c0_13 = arith.constant 0 : index
    %13 = vector.load %arg5[%c0_12, %c0_13] : memref<1x128xf32, #tpu.memory_space<vmem>>, vector<1x128xf32>
    %14 = vector.broadcast %13 : vector<1x128xf32> to vector<8x128xf32>
    %15 = arith.addf %12, %14 : vector<8x128xf32>
    %cst_14 = arith.constant 0.000000e+00 : f32
    %16 = vector.broadcast %cst_14 : f32 to vector<8x128xf32>
    %17 = arith.maximumf %15, %16 : vector<8x128xf32>
    %c0_15 = arith.constant 0 : index
    %c0_16 = arith.constant 0 : index
    %18 = vector.load %arg6[%c0_15, %c0_16] : memref<128x128xf32, #tpu.memory_space<vmem>>, vector<128x128xf32>
    %cst_17 = arith.constant dense<0.000000e+00> : vector<8x128xf32>
    %19 = tpu.matmul %17, %18, %cst_17 {dimension_numbers = #tpu.dot_dimension_numbers<[1], [0], [0], [1], [0, 0, 1, 1], [], []>} : vector<8x128xf32>, vector<128x128xf32>, vector<8x128xf32> -> vector<8x128xf32>
    %c0_18 = arith.constant 0 : index
    %c0_19 = arith.constant 0 : index
    %20 = vector.load %arg7[%c0_18, %c0_19] : memref<1x128xf32, #tpu.memory_space<vmem>>, vector<1x128xf32>
    %21 = vector.broadcast %20 : vector<1x128xf32> to vector<8x128xf32>
    %22 = arith.addf %19, %21 : vector<8x128xf32>
    %c0_20 = arith.constant 0 : index
    %c0_21 = arith.constant 0 : index
    %23 = vector.load %arg8[%c0_20, %c0_21] : memref<8x128xf32, #tpu.memory_space<vmem>>, vector<8x128xf32>
    tpu.vector_store %arg8[%c0_20, %c0_21], %22 {strides = array<i32>} : memref<8x128xf32, #tpu.memory_space<vmem>>, vector<8x128xf32>,
    return
  }
  func.func @transform_0(%arg0: i32) -> (i32, i32, i32) {
    %c0_i32 = arith.constant 0 : i32
    %c0_i32_0 = arith.constant 0 : i32
    %c0_i32_1 = arith.constant 0 : i32
    return %arg0, %c0_i32, %c0_i32_0 : i32, i32, i32
  }
  func.func @transform_1(%arg0: i32) -> (i32, i32) {
    %c0_i32 = arith.constant 0 : i32
    %c0_i32_0 = arith.constant 0 : i32
    %c0_i32_1 = arith.constant 0 : i32
    return %c0_i32, %c0_i32_0 : i32, i32
  }
  func.func @transform_2(%arg0: i32) -> (i32, i32) {
    %c0_i32 = arith.constant 0 : i32
    %c0_i32_0 = arith.constant 0 : i32
    %c0_i32_1 = arith.constant 0 : i32
    return %c0_i32, %c0_i32_0 : i32, i32
  }
  func.func @transform_3(%arg0: i32) -> (i32, i32) {
    %c0_i32 = arith.constant 0 : i32
    %c0_i32_0 = arith.constant 0 : i32
    %c0_i32_1 = arith.constant 0 : i32
    return %c0_i32, %c0_i32_0 : i32, i32
  }
  func.func @transform_4(%arg0: i32) -> (i32, i32) {
    %c0_i32 = arith.constant 0 : i32
    %c0_i32_0 = arith.constant 0 : i32
    %c0_i32_1 = arith.constant 0 : i32
    return %c0_i32, %c0_i32_0 : i32, i32
  }
  func.func @transform_5(%arg0: i32) -> (i32, i32) {
    %c0_i32 = arith.constant 0 : i32
    %c0_i32_0 = arith.constant 0 : i32
    %c0_i32_1 = arith.constant 0 : i32
    return %c0_i32, %c0_i32_0 : i32, i32
  }
  func.func @transform_6(%arg0: i32) -> (i32, i32) {
    %c0_i32 = arith.constant 0 : i32
    %c0_i32_0 = arith.constant 0 : i32
    %c0_i32_1 = arith.constant 0 : i32
    return %c0_i32, %c0_i32_0 : i32, i32
  }
  func.func @transform_7(%arg0: i32) -> (i32, i32) {
    %c0_i32 = arith.constant 0 : i32
    %c0_i32_0 = arith.constant 0 : i32
    return %arg0, %c0_i32 : i32, i32
  }
}

</mosaic_0001>

<llo_original>
// kernel: tpu_custom_call.1
$region0: #{tpu_custom_call.1}
  #allocation0 [shape = 'u32[]', space=smem, size = 0x4, offset = 0x4, fixed_abs, tag = 'smem constant byte address 0x4 - core index']
  #allocation1 [shape = 'u32[144,128]{1,0:T(1,128)}', space=vmem, size = 0x12000, scoped, tag = 'internal scratch']
  %s0 = inlined_call_operand.hbm [shape: f32[8,64,128], index: 0, kind: input, shape index: {}]
  %s1 = inlined_call_operand.hbm [shape: f32[128,128], index: 1, kind: input, shape index: {}]
  %s2 = inlined_call_operand.vmem [shape: f32[1,128], index: 2, kind: input, shape index: {}]
  %s3 = inlined_call_operand.hbm [shape: f32[128,128], index: 3, kind: input, shape index: {}]
  %s4 = inlined_call_operand.vmem [shape: f32[1,128], index: 4, kind: input, shape index: {}]
  %s5 = inlined_call_operand.hbm [shape: f32[128,128], index: 5, kind: input, shape index: {}]
  %s6 = inlined_call_operand.vmem [shape: f32[1,128], index: 6, kind: input, shape index: {}]
  %s7 = inlined_call_operand.hbm [shape: f32[8,128], index: 7, kind: output, shape index: {}]
  %s8 = sld [smem:[#allocation0]]
  $region54: #{tpu_custom_call.1} parent=0
    _
  %s10 = ssub.s32 1, %s8
  %s11 = scalar_select 0, %s10, %s8
  $region1: #{tpu_custom_call.1} parent=0
    #allocation2 [shape = 'u8[262144]{0}', space=vmem, size = 0x40000, scoped, tag = 'input window, operand 0, single buffered']
    #allocation3 [shape = 's32[1]{0}', space=sflag, size = 0x4, scoped, tag = 'scoped memory for tpu_custom_call.1']
    #allocation4 [shape = 's32[1]{0}', space=sflag, size = 0x4, scoped, tag = 'scoped memory for tpu_custom_call.1']
    #allocation5 [shape = 'u8[65536]{0}', space=vmem, size = 0x10000, scoped, tag = 'input window, operand 1, single buffered']
    #allocation6 [shape = 's32[1]{0}', space=sflag, size = 0x4, scoped, tag = 'scoped memory for tpu_custom_call.1']
    #allocation7 [shape = 'u8[65536]{0}', space=vmem, size = 0x10000, scoped, tag = 'input window, operand 3, single buffered']
    #allocation8 [shape = 'u8[65536]{0}', space=vmem, size = 0x10000, scoped, tag = 'input window, operand 5, single buffered']
    #allocation9 [shape = 's32[1]{0}', space=sflag, size = 0x4, scoped, tag = 'scoped memory for tpu_custom_call.1']
    #allocation10 [shape = 'u8[4096]{0}', space=vmem, size = 0x1000, scoped, tag = 'output window, operand 0, single buffered']
    %12 = vsyncpa [#allocation3], 0
    %13 = vsyncpa [#allocation6], 0
    %14 = vsyncpa [#allocation9], 0
    %15 = vsyncpa [#allocation4], 0
    // Predicated region
    $region2: #{tpu_custom_call.1} parent=1 // pred_check
      _
    $region3: #{tpu_custom_call.1} parent=1 // pred_check_branch
      %17 = sbr.rel (0) target = $region5
    $region4: #{tpu_custom_call.1} parent=1 // pred_region
      %s19 = ssub.s32 8192, 8192
      %20 = vsyncadd [#allocation3], %s19
      %s21 = sshll.u32 [#allocation2], 4
      %s22 = int_to_ptr.vmem [resolvable:$true] %s21
      %27 = dma.hbm_to_vmem [thread:$0]  %s0, 8192, %s22, [#allocation3], 128, 128, 8
    $region5: #{tpu_custom_call.1} parent=1 // pred_fallthru
      _
    // Predicated region
    $region6: #{tpu_custom_call.1} parent=1 // pred_check
      _
    $region7: #{tpu_custom_call.1} parent=1 // pred_check_branch
      %29 = sbr.rel (0) target = $region9
    $region8: #{tpu_custom_call.1} parent=1 // pred_region
      %s31 = ssub.s32 2048, 2048
      %32 = vsyncadd [#allocation6], %s31
      %s33 = sshll.u32 [#allocation5], 4
      %s34 = int_to_ptr.vmem [resolvable:$true] %s33
      %39 = dma.hbm_to_vmem [thread:$0]  %s1, 2048, %s34, [#allocation6], 128, 128, 8
    $region9: #{tpu_custom_call.1} parent=1 // pred_fallthru
      _
    // Predicated region
    $region10: #{tpu_custom_call.1} parent=1 // pred_check
      _
    $region11: #{tpu_custom_call.1} parent=1 // pred_check_branch
      %41 = sbr.rel (0) target = $region13
    $region12: #{tpu_custom_call.1} parent=1 // pred_region
      _
    $region13: #{tpu_custom_call.1} parent=1 // pred_fallthru
      _
    // Predicated region
    $region14: #{tpu_custom_call.1} parent=1 // pred_check
      _
    $region15: #{tpu_custom_call.1} parent=1 // pred_check_branch
      %43 = sbr.rel (0) target = $region17
    $region16: #{tpu_custom_call.1} parent=1 // pred_region
      %s45 = ssub.s32 2048, 2048
      %46 = vsyncadd [#allocation6], %s45
      %s47 = sshll.u32 [#allocation7], 4
      %s48 = int_to_ptr.vmem [resolvable:$true] %s47
      %53 = dma.hbm_to_vmem [thread:$0]  %s3, 2048, %s48, [#allocation6], 128, 128, 8
    $region17: #{tpu_custom_call.1} parent=1 // pred_fallthru
      _
    // Predicated region
    $region18: #{tpu_custom_call.1} parent=1 // pred_check
      _
    $region19: #{tpu_custom_call.1} parent=1 // pred_check_branch
      %55 = sbr.rel (0) target = $region21
    $region20: #{tpu_custom_call.1} parent=1 // pred_region
      _
    $region21: #{tpu_custom_call.1} parent=1 // pred_fallthru
      _
    // Predicated region
    $region22: #{tpu_custom_call.1} parent=1 // pred_check
      _
    $region23: #{tpu_custom_call.1} parent=1 // pred_check_branch
      %57 = sbr.rel (0) target = $region25
    $region24: #{tpu_custom_call.1} parent=1 // pred_region
      %s59 = ssub.s32 2048, 2048
      %60 = vsyncadd [#allocation9], %s59
      %s61 = sshll.u32 [#allocation8], 4
      %s62 = int_to_ptr.vmem [resolvable:$true] %s61
      %67 = dma.hbm_to_vmem [thread:$0]  %s5, 2048, %s62, [#allocation9], 128, 128, 8
    $region25: #{tpu_custom_call.1} parent=1 // pred_fallthru
      _
    // Predicated region
    $region26: #{tpu_custom_call.1} parent=1 // pred_check
      _
    $region27: #{tpu_custom_call.1} parent=1 // pred_check_branch
      %69 = sbr.rel (0) target = $region29
    $region28: #{tpu_custom_call.1} parent=1 // pred_region
      _
    $region29: #{tpu_custom_call.1} parent=1 // pred_fallthru
      _
    // Predicated region
    $region30: #{tpu_custom_call.1} parent=1 // pred_check
      _
    $region31: #{tpu_custom_call.1} parent=1 // pred_check_branch
      %71 = sbr.rel (0) target = $region33
    $region32: #{tpu_custom_call.1} parent=1 // pred_region
      %72 = dma.done [#allocation3], 8192
    $region33: #{tpu_custom_call.1} parent=1 // pred_fallthru
      _
    // Predicated region
    $region34: #{tpu_custom_call.1} parent=1 // pred_check
      _
    $region35: #{tpu_custom_call.1} parent=1 // pred_check_branch
      %74 = sbr.rel (0) target = $region37
    $region36: #{tpu_custom_call.1} parent=1 // pred_region
      %75 = dma.done [#allocation6], 2048
    $region37: #{tpu_custom_call.1} parent=1 // pred_fallthru
      _
    // Predicated region
    $region38: #{tpu_custom_call.1} parent=1 // pred_check
      _
    $region39: #{tpu_custom_call.1} parent=1 // pred_check_branch
      %77 = sbr.rel (0) target = $region41
    $region40: #{tpu_custom_call.1} parent=1 // pred_region
      %78 = dma.done [#allocation6], 2048
    $region41: #{tpu_custom_call.1} parent=1 // pred_fallthru
      _
    // Predicated region
    $region42: #{tpu_custom_call.1} parent=1 // pred_check
      _
    $region43: #{tpu_custom_call.1} parent=1 // pred_check_branch
      %80 = sbr.rel (0) target = $region45
    $region44: #{tpu_custom_call.1} parent=1 // pred_region
      %81 = dma.done [#allocation9], 2048
    $region45: #{tpu_custom_call.1} parent=1 // pred_fallthru
      _
    %v82 = vld [vmem:[#allocation2] sm:$0xff]
    %v83 = vld [vmem:[#allocation2 + $0x8] sm:$0xff]
    %v84 = vld [vmem:[#allocation2 + $0x10] sm:$0xff]
    %v85 = vld [vmem:[#allocation2 + $0x18] sm:$0xff]
    %v86 = vld [vmem:[#allocation2 + $0x20] sm:$0xff]
    %v87 = vld [vmem:[#allocation2 + $0x28] sm:$0xff]
    %v88 = vld [vmem:[#allocation2 + $0x30] sm:$0xff]
    %v89 = vld [vmem:[#allocation2 + $0x38] sm:$0xff]
    %v90 = vld [vmem:[#allocation2 + $0x40] sm:$0xff]
    %v91 = vld [vmem:[#allocation2 + $0x48] sm:$0xff]
    %v92 = vld [vmem:[#allocation2 + $0x50] sm:$0xff]
    %v93 = vld [vmem:[#allocation2 + $0x58] sm:$0xff]
    %v94 = vld [vmem:[#allocation2 + $0x60] sm:$0xff]
    %v95 = vld [vmem:[#allocation2 + $0x68] sm:$0xff]
    %v96 = vld [vmem:[#allocation2 + $0x70] sm:$0xff]
    %v97 = vld [vmem:[#allocation2 + $0x78] sm:$0xff]
    %v98 = vld [vmem:[#allocation2 + $0x80] sm:$0xff]
    %v99 = vld [vmem:[#allocation2 + $0x88] sm:$0xff]
    %v100 = vld [vmem:[#allocation2 + $0x90] sm:$0xff]
    %v101 = vld [vmem:[#allocation2 + $0x98] sm:$0xff]
    %v102 = vld [vmem:[#allocation2 + $0xa0] sm:$0xff]
    %v103 = vld [vmem:[#allocation2 + $0xa8] sm:$0xff]
    %v104 = vld [vmem:[#allocation2 + $0xb0] sm:$0xff]
    %v105 = vld [vmem:[#allocation2 + $0xb8] sm:$0xff]
    %v106 = vld [vmem:[#allocation2 + $0xc0] sm:$0xff]
    %v107 = vld [vmem:[#allocation2 + $0xc8] sm:$0xff]
    %v108 = vld [vmem:[#allocation2 + $0xd0] sm:$0xff]
    %v109 = vld [vmem:[#allocation2 + $0xd8] sm:$0xff]
    %v110 = vld [vmem:[#allocation2 + $0xe0] sm:$0xff]
    %v111 = vld [vmem:[#allocation2 + $0xe8] sm:$0xff]
    %v112 = vld [vmem:[#allocation2 + $0xf0] sm:$0xff]
    %v113 = vld [vmem:[#allocation2 + $0xf8] sm:$0xff]
    %v114 = vld [vmem:[#allocation2 + $0x100] sm:$0xff]
    %v115 = vld [vmem:[#allocation2 + $0x108] sm:$0xff]
    %v116 = vld [vmem:[#allocation2 + $0x110] sm:$0xff]
    %v117 = vld [vmem:[#allocation2 + $0x118] sm:$0xff]
    %v118 = vld [vmem:[#allocation2 + $0x120] sm:$0xff]
    %v119 = vld [vmem:[#allocation2 + $0x128] sm:$0xff]
    %v120 = vld [vmem:[#allocation2 + $0x130] sm:$0xff]
    %v121 = vld [vmem:[#allocation2 + $0x138] sm:$0xff]
    %v122 = vld [vmem:[#allocation2 + $0x140] sm:$0xff]
    %v123 = vld [vmem:[#allocation2 + $0x148] sm:$0xff]
    %v124 = vld [vmem:[#allocation2 + $0x150] sm:$0xff]
    %v125 = vld [vmem:[#allocation2 + $0x158] sm:$0xff]
    %v126 = vld [vmem:[#allocation2 + $0x160] sm:$0xff]
    %v127 = vld [vmem:[#allocation2 + $0x168] sm:$0xff]
    %v128 = vld [vmem:[#allocation2 + $0x170] sm:$0xff]
    %v129 = vld [vmem:[#allocation2 + $0x178] sm:$0xff]
    %v130 = vld [vmem:[#allocation2 + $0x180] sm:$0xff]
    %v131 = vld [vmem:[#allocation2 + $0x188] sm:$0xff]
    %v132 = vld [vmem:[#allocation2 + $0x190] sm:$0xff]
    %v133 = vld [vmem:[#allocation2 + $0x198] sm:$0xff]
    %v134 = vld [vmem:[#allocation2 + $0x1a0] sm:$0xff]
    %v135 = vld [vmem:[#allocation2 + $0x1a8] sm:$0xff]
    %v136 = vld [vmem:[#allocation2 + $0x1b0] sm:$0xff]
    %v137 = vld [vmem:[#allocation2 + $0x1b8] sm:$0xff]
    %v138 = vld [vmem:[#allocation2 + $0x1c0] sm:$0xff]
    %v139 = vld [vmem:[#allocation2 + $0x1c8] sm:$0xff]
    %v140 = vld [vmem:[#allocation2 + $0x1d0] sm:$0xff]
    %v141 = vld [vmem:[#allocation2 + $0x1d8] sm:$0xff]
    %v142 = vld [vmem:[#allocation2 + $0x1e0] sm:$0xff]
    %v143 = vld [vmem:[#allocation2 + $0x1e8] sm:$0xff]
    %v144 = vld [vmem:[#allocation2 + $0x1f0] sm:$0xff]
    %v145 = vld [vmem:[#allocation2 + $0x1f8] sm:$0xff]
    %v146 = vadd.f32 %v82, %v83
    %v147 = vadd.f32 %v146, %v84
    %v148 = vadd.f32 %v147, %v85
    %v149 = vadd.f32 %v148, %v86
    %v150 = vadd.f32 %v149, %v87
    %v151 = vadd.f32 %v150, %v88
    %v152 = vadd.f32 %v151, %v89
    %v153 = vrot.slane %v152, 4
    %v154 = vadd.f32 %v152, %v153
    %v155 = vrot.slane %v154, 2
    %v156 = vadd.f32 %v154, %v155
    %v157 = vrot.slane %v156, 1
    %v158 = vadd.f32 %v156, %v157
    %v159 = vadd.f32 %v90, %v91
    %v160 = vadd.f32 %v159, %v92
    %v161 = vadd.f32 %v160, %v93
    %v162 = vadd.f32 %v161, %v94
    %v163 = vadd.f32 %v162, %v95
    %v164 = vadd.f32 %v163, %v96
    %v165 = vadd.f32 %v164, %v97
    %v166 = vrot.slane %v165, 4
    %v167 = vadd.f32 %v165, %v166
    %v168 = vrot.slane %v167, 2
    %v169 = vadd.f32 %v167, %v168
    %v170 = vrot.slane %v169, 1
    %v171 = vadd.f32 %v169, %v170
    %v172 = vadd.f32 %v98, %v99
    %v173 = vadd.f32 %v172, %v100
    %v174 = vadd.f32 %v173, %v101
    %v175 = vadd.f32 %v174, %v102
    %v176 = vadd.f32 %v175, %v103
    %v177 = vadd.f32 %v176, %v104
    %v178 = vadd.f32 %v177, %v105
    %v179 = vrot.slane %v178, 4
    %v180 = vadd.f32 %v178, %v179
    %v181 = vrot.slane %v180, 2
    %v182 = vadd.f32 %v180, %v181
    %v183 = vrot.slane %v182, 1
    %v184 = vadd.f32 %v182, %v183
    %v185 = vadd.f32 %v106, %v107
    %v186 = vadd.f32 %v185, %v108
    %v187 = vadd.f32 %v186, %v109
    %v188 = vadd.f32 %v187, %v110
    %v189 = vadd.f32 %v188, %v111
    %v190 = vadd.f32 %v189, %v112
    %v191 = vadd.f32 %v190, %v113
    %v192 = vrot.slane %v191, 4
    %v193 = vadd.f32 %v191, %v192
    %v194 = vrot.slane %v193, 2
    %v195 = vadd.f32 %v193, %v194
    %v196 = vrot.slane %v195, 1
    %v197 = vadd.f32 %v195, %v196
    %v198 = vadd.f32 %v114, %v115
    %v199 = vadd.f32 %v198, %v116
    %v200 = vadd.f32 %v199, %v117
    %v201 = vadd.f32 %v200, %v118
    %v202 = vadd.f32 %v201, %v119
    %v203 = vadd.f32 %v202, %v120
    %v204 = vadd.f32 %v203, %v121
    %v205 = vrot.slane %v204, 4
    %v206 = vadd.f32 %v204, %v205
    %v207 = vrot.slane %v206, 2
    %v208 = vadd.f32 %v206, %v207
    %v209 = vrot.slane %v208, 1
    %v210 = vadd.f32 %v208, %v209
    %v211 = vadd.f32 %v122, %v123
    %v212 = vadd.f32 %v211, %v124
    %v213 = vadd.f32 %v212, %v125
    %v214 = vadd.f32 %v213, %v126
    %v215 = vadd.f32 %v214, %v127
    %v216 = vadd.f32 %v215, %v128
    %v217 = vadd.f32 %v216, %v129
    %v218 = vrot.slane %v217, 4
    %v219 = vadd.f32 %v217, %v218
    %v220 = vrot.slane %v219, 2
    %v221 = vadd.f32 %v219, %v220
    %v222 = vrot.slane %v221, 1
    %v223 = vadd.f32 %v221, %v222
    %v224 = vadd.f32 %v130, %v131
    %v225 = vadd.f32 %v224, %v132
    %v226 = vadd.f32 %v225, %v133
    %v227 = vadd.f32 %v226, %v134
    %v228 = vadd.f32 %v227, %v135
    %v229 = vadd.f32 %v228, %v136
    %v230 = vadd.f32 %v229, %v137
    %v231 = vrot.slane %v230, 4
    %v232 = vadd.f32 %v230, %v231
    %v233 = vrot.slane %v232, 2
    %v234 = vadd.f32 %v232, %v233
    %v235 = vrot.slane %v234, 1
    %v236 = vadd.f32 %v234, %v235
    %v237 = vadd.f32 %v138, %v139
    %v238 = vadd.f32 %v237, %v140
    %v239 = vadd.f32 %v238, %v141
    %v240 = vadd.f32 %v239, %v142
    %v241 = vadd.f32 %v240, %v143
    %v242 = vadd.f32 %v241, %v144
    %v243 = vadd.f32 %v242, %v145
    %v244 = vrot.slane %v243, 4
    %v245 = vadd.f32 %v243, %v244
    %v246 = vrot.slane %v245, 2
    %v247 = vadd.f32 %v245, %v246
    %v248 = vrot.slane %v247, 1
    %v249 = vadd.f32 %v247, %v248
    %v250 = vrcp.pop 64.0
    %v251 = vmul.f32 %v158, %v250
    %v252 = vmul.f32 %v171, %v250
    %v253 = vmul.f32 %v184, %v250
    %v254 = vmul.f32 %v197, %v250
    %v255 = vmul.f32 %v210, %v250
    %v256 = vmul.f32 %v223, %v250
    %v257 = vmul.f32 %v236, %v250
    %v258 = vmul.f32 %v249, %v250
    %v259 = vld [vmem:[#allocation5] sm:$0xff]
    %v260 = vld [vmem:[#allocation5 + $0x8] sm:$0xff]
    %v261 = vld [vmem:[#allocation5 + $0x10] sm:$0xff]
    %v262 = vld [vmem:[#allocation5 + $0x18] sm:$0xff]
    %v263 = vld [vmem:[#allocation5 + $0x20] sm:$0xff]
    %v264 = vld [vmem:[#allocation5 + $0x28] sm:$0xff]
    %v265 = vld [vmem:[#allocation5 + $0x30] sm:$0xff]
    %v266 = vld [vmem:[#allocation5 + $0x38] sm:$0xff]
    %v267 = vld [vmem:[#allocation5 + $0x40] sm:$0xff]
    %v268 = vld [vmem:[#allocation5 + $0x48] sm:$0xff]
    %v269 = vld [vmem:[#allocation5 + $0x50] sm:$0xff]
    %v270 = vld [vmem:[#allocation5 + $0x58] sm:$0xff]
    %v271 = vld [vmem:[#allocation5 + $0x60] sm:$0xff]
    %v272 = vld [vmem:[#allocation5 + $0x68] sm:$0xff]
    %v273 = vld [vmem:[#allocation5 + $0x70] sm:$0xff]
    %v274 = vld [vmem:[#allocation5 + $0x78] sm:$0xff]
    %v275 = vld [vmem:[%s2] sm:$0x1]
    %v277 = vlaneseq
    %v278 = vshrl.u32 %v277, 7
    %v279 = vsub.s32 0, %v278
    %v280 = vrot.slane %v275, %v279
    %vm290 = vcmask 1041409
    %v291 = vsel %vm290, %v252, %v251
    %vm292 = vcmask 1042434
    %v293 = vsel %vm292, %v253, %v291
    %vm294 = vcmask 1043459
    %v295 = vsel %vm294, %v254, %v293
    %vm296 = vcmask 1044484
    %v297 = vsel %vm296, %v255, %v295
    %vm298 = vcmask 1045509
    %v299 = vsel %vm298, %v256, %v297
    %vm300 = vcmask 1046534
    %v301 = vsel %vm300, %v257, %v299
    %vm302 = vcmask 1047559
    %v303 = vsel %vm302, %v258, %v301
    %305 = vmatprep.subr.mxu0 0.0
    %306 = vmatpush1.msra.mxu0 %v259
    %307 = vmatprep.subr.mxu0 0.0
    %308 = vmatpush1.msra.mxu0 %v260
    %309 = vmatprep.subr.mxu0 0.0
    %310 = vmatpush1.msra.mxu0 %v261
    %311 = vmatprep.subr.mxu0 0.0
    %312 = vmatpush1.msra.mxu0 %v262
    %313 = vmatprep.subr.mxu0 0.0
    %314 = vmatpush1.msra.mxu0 %v263
    %315 = vmatprep.subr.mxu0 0.0
    %316 = vmatpush1.msra.mxu0 %v264
    %317 = vmatprep.subr.mxu0 0.0
    %318 = vmatpush1.msra.mxu0 %v265
    %319 = vmatprep.subr.mxu0 0.0
    %320 = vmatpush1.msra.mxu0 %v266
    %321 = vmatprep.subr.mxu0 0.0
    %322 = vmatpush1.msra.mxu0 %v267
    %323 = vmatprep.subr.mxu0 0.0
    %324 = vmatpush1.msra.mxu0 %v268
    %325 = vmatprep.subr.mxu0 0.0
    %326 = vmatpush1.msra.mxu0 %v269
    %327 = vmatprep.subr.mxu0 0.0
    %328 = vmatpush1.msra.mxu0 %v270
    %329 = vmatprep.subr.mxu0 0.0
    %330 = vmatpush1.msra.mxu0 %v271
    %331 = vmatprep.subr.mxu0 0.0
    %332 = vmatpush1.msra.mxu0 %v272
    %333 = vmatprep.subr.mxu0 0.0
    %334 = vmatpush1.msra.mxu0 %v273
    %335 = vmatprep.subr.mxu0 0.0
    %336 = vmatpush1.msra.mxu0 %v274
    %337 = vmatprep.subr.mxu0 0.0
    %338 = vmatpush1.msra.mxu0 0.0
    %339 = vmatprep.subr.mxu0 0.0
    %340 = vmatpush1.msra.mxu0 0.0
    %341 = vmatprep.subr.mxu0 0.0
    %342 = vmatpush1.msra.mxu0 0.0
    %343 = vmatprep.subr.mxu0 0.0
    %344 = vmatpush1.msra.mxu0 0.0
    %345 = vmatprep.subr.mxu0 0.0
    %346 = vmatpush1.msra.mxu0 0.0
    %347 = vmatprep.subr.mxu0 0.0
    %348 = vmatpush1.msra.mxu0 0.0
    %349 = vmatprep.subr.mxu0 0.0
    %350 = vmatpush1.msra.mxu0 0.0
    %351 = vmatprep.subr.mxu0 0.0
    %352 = vmatpush1.msra.mxu0 0.0
    %353 = vmatprep.subr.mxu0 0.0
    %354 = vmatpush1.msra.mxu0 0.0
    %355 = vmatprep.subr.mxu0 0.0
    %356 = vmatpush1.msra.mxu0 0.0
    %357 = vmatprep.subr.mxu0 0.0
    %358 = vmatpush1.msra.mxu0 0.0
    %359 = vmatprep.subr.mxu0 0.0
    %360 = vmatpush1.msra.mxu0 0.0
    %361 = vmatprep.subr.mxu0 0.0
    %362 = vmatpush1.msra.mxu0 0.0
    %363 = vmatprep.subr.mxu0 0.0
    %364 = vmatpush1.msra.mxu0 0.0
    %365 = vmatprep.subr.mxu0 0.0
    %366 = vmatpush1.msra.mxu0 0.0
    %367 = vmatprep.subr.mxu0 0.0
    %368 = vmatpush1.msra.mxu0 0.0
    %369 = vmatprep.mubr.f32.mxu0 0.0
    %370 = vmatmul.mubr.f32.gmra.mrb[0].mxu0 %v303
    %v371 = vpop.f32.mrb[0].mxu0
    %v372 = vadd.f32 %v280, %v371
    %v373 = vpop.f32.mrb[0].mxu0
    %374 = vdwg.mxu0
    %v375 = vmax.f32 %v372, 0.0
    %v376 = vld [vmem:[#allocation7] sm:$0xff]
    %v377 = vld [vmem:[#allocation7 + $0x8] sm:$0xff]
    %v378 = vld [vmem:[#allocation7 + $0x10] sm:$0xff]
    %v379 = vld [vmem:[#allocation7 + $0x18] sm:$0xff]
    %v380 = vld [vmem:[#allocation7 + $0x20] sm:$0xff]
    %v381 = vld [vmem:[#allocation7 + $0x28] sm:$0xff]
    %v382 = vld [vmem:[#allocation7 + $0x30] sm:$0xff]
    %v383 = vld [vmem:[#allocation7 + $0x38] sm:$0xff]
    %v384 = vld [vmem:[#allocation7 + $0x40] sm:$0xff]
    %v385 = vld [vmem:[#allocation7 + $0x48] sm:$0xff]
    %v386 = vld [vmem:[#allocation7 + $0x50] sm:$0xff]
    %v387 = vld [vmem:[#allocation7 + $0x58] sm:$0xff]
    %v388 = vld [vmem:[#allocation7 + $0x60] sm:$0xff]
    %v389 = vld [vmem:[#allocation7 + $0x68] sm:$0xff]
    %v390 = vld [vmem:[#allocation7 + $0x70] sm:$0xff]
    %v391 = vld [vmem:[#allocation7 + $0x78] sm:$0xff]
    %v392 = vld [vmem:[%s4] sm:$0x1]
    %v394 = vlaneseq
    %v395 = vshrl.u32 %v394, 7
    %v396 = vsub.s32 0, %v395
    %v397 = vrot.slane %v392, %v396
    %399 = vmatprep.subr.mxu0 0.0
    %400 = vmatpush1.msra.mxu0 %v376
    %401 = vmatprep.subr.mxu0 0.0
    %402 = vmatpush1.msra.mxu0 %v377
    %403 = vmatprep.subr.mxu0 0.0
    %404 = vmatpush1.msra.mxu0 %v378
    %405 = vmatprep.subr.mxu0 0.0
    %406 = vmatpush1.msra.mxu0 %v379
    %407 = vmatprep.subr.mxu0 0.0
    %408 = vmatpush1.msra.mxu0 %v380
    %409 = vmatprep.subr.mxu0 0.0
    %410 = vmatpush1.msra.mxu0 %v381
    %411 = vmatprep.subr.mxu0 0.0
    %412 = vmatpush1.msra.mxu0 %v382
    %413 = vmatprep.subr.mxu0 0.0
    %414 = vmatpush1.msra.mxu0 %v383
    %415 = vmatprep.subr.mxu0 0.0
    %416 = vmatpush1.msra.mxu0 %v384
    %417 = vmatprep.subr.mxu0 0.0
    %418 = vmatpush1.msra.mxu0 %v385
    %419 = vmatprep.subr.mxu0 0.0
    %420 = vmatpush1.msra.mxu0 %v386
    %421 = vmatprep.subr.mxu0 0.0
    %422 = vmatpush1.msra.mxu0 %v387
    %423 = vmatprep.subr.mxu0 0.0
    %424 = vmatpush1.msra.mxu0 %v388
    %425 = vmatprep.subr.mxu0 0.0
    %426 = vmatpush1.msra.mxu0 %v389
    %427 = vmatprep.subr.mxu0 0.0
    %428 = vmatpush1.msra.mxu0 %v390
    %429 = vmatprep.subr.mxu0 0.0
    %430 = vmatpush1.msra.mxu0 %v391
    %431 = vmatprep.subr.mxu0 0.0
    %432 = vmatpush1.msra.mxu0 0.0
    %433 = vmatprep.subr.mxu0 0.0
    %434 = vmatpush1.msra.mxu0 0.0
    %435 = vmatprep.subr.mxu0 0.0
    %436 = vmatpush1.msra.mxu0 0.0
    %437 = vmatprep.subr.mxu0 0.0
    %438 = vmatpush1.msra.mxu0 0.0
    %439 = vmatprep.subr.mxu0 0.0
    %440 = vmatpush1.msra.mxu0 0.0
    %441 = vmatprep.subr.mxu0 0.0
    %442 = vmatpush1.msra.mxu0 0.0
    %443 = vmatprep.subr.mxu0 0.0
    %444 = vmatpush1.msra.mxu0 0.0
    %445 = vmatprep.subr.mxu0 0.0
    %446 = vmatpush1.msra.mxu0 0.0
    %447 = vmatprep.subr.mxu0 0.0
    %448 = vmatpush1.msra.mxu0 0.0
    %449 = vmatprep.subr.mxu0 0.0
    %450 = vmatpush1.msra.mxu0 0.0
    %451 = vmatprep.subr.mxu0 0.0
    %452 = vmatpush1.msra.mxu0 0.0
    %453 = vmatprep.subr.mxu0 0.0
    %454 = vmatpush1.msra.mxu0 0.0
    %455 = vmatprep.subr.mxu0 0.0
    %456 = vmatpush1.msra.mxu0 0.0
    %457 = vmatprep.subr.mxu0 0.0
    %458 = vmatpush1.msra.mxu0 0.0
    %459 = vmatprep.subr.mxu0 0.0
    %460 = vmatpush1.msra.mxu0 0.0
    %461 = vmatprep.subr.mxu0 0.0
    %462 = vmatpush1.msra.mxu0 0.0
    %463 = vmatprep.mubr.f32.mxu0 0.0
    %464 = vmatmul.mubr.f32.gmra.mrb[0].mxu0 %v375
    %v465 = vpop.f32.mrb[0].mxu0
    %v466 = vadd.f32 %v397, %v465
    %v467 = vpop.f32.mrb[0].mxu0
    %468 = vdwg.mxu0
    %v469 = vmax.f32 %v466, 0.0
    %v470 = vld [vmem:[#allocation8] sm:$0xff]
    %v471 = vld [vmem:[#allocation8 + $0x8] sm:$0xff]
    %v472 = vld [vmem:[#allocation8 + $0x10] sm:$0xff]
    %v473 = vld [vmem:[#allocation8 + $0x18] sm:$0xff]
    %v474 = vld [vmem:[#allocation8 + $0x20] sm:$0xff]
    %v475 = vld [vmem:[#allocation8 + $0x28] sm:$0xff]
    %v476 = vld [vmem:[#allocation8 + $0x30] sm:$0xff]
    %v477 = vld [vmem:[#allocation8 + $0x38] sm:$0xff]
    %v478 = vld [vmem:[#allocation8 + $0x40] sm:$0xff]
    %v479 = vld [vmem:[#allocation8 + $0x48] sm:$0xff]
    %v480 = vld [vmem:[#allocation8 + $0x50] sm:$0xff]
    %v481 = vld [vmem:[#allocation8 + $0x58] sm:$0xff]
    %v482 = vld [vmem:[#allocation8 + $0x60] sm:$0xff]
    %v483 = vld [vmem:[#allocation8 + $0x68] sm:$0xff]
    %v484 = vld [vmem:[#allocation8 + $0x70] sm:$0xff]
    %v485 = vld [vmem:[#allocation8 + $0x78] sm:$0xff]
    %v486 = vld [vmem:[%s6] sm:$0x1]
    %v488 = vlaneseq
    %v489 = vshrl.u32 %v488, 7
    %v490 = vsub.s32 0, %v489
    %v491 = vrot.slane %v486, %v490
    %493 = vmatprep.subr.mxu0 0.0
    %494 = vmatpush1.msra.mxu0 %v470
    %495 = vmatprep.subr.mxu0 0.0
    %496 = vmatpush1.msra.mxu0 %v471
    %497 = vmatprep.subr.mxu0 0.0
    %498 = vmatpush1.msra.mxu0 %v472
    %499 = vmatprep.subr.mxu0 0.0
    %500 = vmatpush1.msra.mxu0 %v473
    %501 = vmatprep.subr.mxu0 0.0
    %502 = vmatpush1.msra.mxu0 %v474
    %503 = vmatprep.subr.mxu0 0.0
    %504 = vmatpush1.msra.mxu0 %v475
    %505 = vmatprep.subr.mxu0 0.0
    %506 = vmatpush1.msra.mxu0 %v476
    %507 = vmatprep.subr.mxu0 0.0
    %508 = vmatpush1.msra.mxu0 %v477
    %509 = vmatprep.subr.mxu0 0.0
    %510 = vmatpush1.msra.mxu0 %v478
    %511 = vmatprep.subr.mxu0 0.0
    %512 = vmatpush1.msra.mxu0 %v479
    %513 = vmatprep.subr.mxu0 0.0
    %514 = vmatpush1.msra.mxu0 %v480
    %515 = vmatprep.subr.mxu0 0.0
    %516 = vmatpush1.msra.mxu0 %v481
    %517 = vmatprep.subr.mxu0 0.0
    %518 = vmatpush1.msra.mxu0 %v482
    %519 = vmatprep.subr.mxu0 0.0
    %520 = vmatpush1.msra.mxu0 %v483
    %521 = vmatprep.subr.mxu0 0.0
    %522 = vmatpush1.msra.mxu0 %v484
    %523 = vmatprep.subr.mxu0 0.0
    %524 = vmatpush1.msra.mxu0 %v485
    %525 = vmatprep.subr.mxu0 0.0
    %526 = vmatpush1.msra.mxu0 0.0
    %527 = vmatprep.subr.mxu0 0.0
    %528 = vmatpush1.msra.mxu0 0.0
    %529 = vmatprep.subr.mxu0 0.0
    %530 = vmatpush1.msra.mxu0 0.0
    %531 = vmatprep.subr.mxu0 0.0
    %532 = vmatpush1.msra.mxu0 0.0
    %533 = vmatprep.subr.mxu0 0.0
    %534 = vmatpush1.msra.mxu0 0.0
    %535 = vmatprep.subr.mxu0 0.0
    %536 = vmatpush1.msra.mxu0 0.0
    %537 = vmatprep.subr.mxu0 0.0
    %538 = vmatpush1.msra.mxu0 0.0
    %539 = vmatprep.subr.mxu0 0.0
    %540 = vmatpush1.msra.mxu0 0.0
    %541 = vmatprep.subr.mxu0 0.0
    %542 = vmatpush1.msra.mxu0 0.0
    %543 = vmatprep.subr.mxu0 0.0
    %544 = vmatpush1.msra.mxu0 0.0
    %545 = vmatprep.subr.mxu0 0.0
    %546 = vmatpush1.msra.mxu0 0.0
    %547 = vmatprep.subr.mxu0 0.0
    %548 = vmatpush1.msra.mxu0 0.0
    %549 = vmatprep.subr.mxu0 0.0
    %550 = vmatpush1.msra.mxu0 0.0
    %551 = vmatprep.subr.mxu0 0.0
    %552 = vmatpush1.msra.mxu0 0.0
    %553 = vmatprep.subr.mxu0 0.0
    %554 = vmatpush1.msra.mxu0 0.0
    %555 = vmatprep.subr.mxu0 0.0
    %556 = vmatpush1.msra.mxu0 0.0
    %557 = vmatprep.mubr.f32.mxu0 0.0
    %558 = vmatmul.mubr.f32.gmra.mrb[0].mxu0 %v469
    %v559 = vpop.f32.mrb[0].mxu0
    %v560 = vadd.f32 %v491, %v559
    %v561 = vpop.f32.mrb[0].mxu0
    %562 = vdwg.mxu0
    %563 = vst [vmem:[#allocation10] sm:$0xff] %v560
    // Predicated region
    $region46: #{tpu_custom_call.1} parent=1 // pred_check
      _
    $region47: #{tpu_custom_call.1} parent=1 // pred_check_branch
      %565 = sbr.rel (0) target = $region49
    $region48: #{tpu_custom_call.1} parent=1 // pred_region
      %s567 = ssub.s32 128, 128
      %568 = vsyncadd [#allocation4], %s567
      %s570 = sshll.u32 [#allocation10], 4
      %s571 = int_to_ptr.vmem [resolvable:$true] %s570
      %573 = dma.vmem_to_hbm [thread:$0]  %s571, 128, %s7, [#allocation4]
    $region49: #{tpu_custom_call.1} parent=1 // pred_fallthru
      _
    // Predicated region
    $region50: #{tpu_custom_call.1} parent=1 // pred_check
      _
    $region51: #{tpu_custom_call.1} parent=1 // pred_check_branch
      %575 = sbr.rel (0) target = $region53
    $region52: #{tpu_custom_call.1} parent=1 // pred_region
      %576 = dma.done [#allocation4], 128
    $region53: #{tpu_custom_call.1} parent=1 // pred_fallthru
      _
    %577 = vsyncpa [#allocation3], 1
    %578 = vsyncpa [#allocation6], 1
    %579 = vsyncpa [#allocation9], 1
    %580 = vsyncpa [#allocation4], 1

</llo_original>
